<compile_context>
chip_gen: v7x
topology: tpu7x:2x2x1
jax: 0.10.0
libtpu: 0.0.40
codegen_flags: <defaults>
</compile_context>

<pallas_src>
import jax
import jax.numpy as jnp
from jax.experimental import pallas as pl
from jax.experimental.pallas import tpu as pltpu

_NUM_REPEATS = 3
_VMEM_LIMIT_BYTES = 32 << 20  # safe on v5e/v6e/v7x; covers 2*(T) + 2*(3T)


def _repeat3_kernel(x_ref, o_ref):
    # x_ref: (ns, tr, lane); o_ref: (ns, 3, tr, lane).
    # Single lane-dense load, one broadcast store covering all three repeats.
    o_ref[...] = jnp.broadcast_to(x_ref[...][:, None, :, :], o_ref.shape)


def _tile_budget_bytes() -> int:
    """Per-generation input-tile byte budget (double-buffered in+3*out ~ 8T)."""
    try:
        kind = jax.devices()[0].device_kind.lower()
    except Exception:  # pragma: no cover - CPU/interpret fallback
        kind = ""
    if "v6" in kind:
        return 3 << 20          # 3 MiB -> ~24 MiB pipelined, under 32 MiB limit
    # v5e (16 MiB scoped default) and v7x (64 MiB physical, shared pressure):
    return 3 << 19              # 1.5 MiB -> ~12 MiB pipelined


def _pick_layout(m: int, itemsize: int):
    """Choose (lane, rows, pad) for the per-sample slab of m elements."""
    packed = {4: 8, 2: 16, 1: 32}.get(itemsize, 8)  # packed sublanes per vreg
    # 1) Largest lane (multiple of 128) dividing m with a full sublane dim.
    for lane in (4096, 2048, 1024, 512, 256, 128):
        if m % lane == 0 and (m // lane) >= packed:
            return lane, m // lane, 0, packed
    # 2) Sample too small for a full vreg: any dividing lane (rows == full dim
    #    is still a legal, unmasked-lane block).
    for lane in (512, 256, 128):
        if m % lane == 0:
            return lane, m // lane, 0, packed
    # 3) Unaligned: pad the flattened slab up to a multiple of 128 (wrapper
    #    pads before the kernel and slices after), keeping every store
    #    lane-dense.
    lane = 128
    rows = pl.cdiv(m, lane)
    return lane, rows, rows * lane - m, packed


def _pick_tile_rows(rows: int, lane: int, itemsize: int, packed: int,
                    budget_bytes: int) -> int:
    """Rows per tile: multiple of the packed-sublane count, dividing rows when
    possible (no masked edge tile), capped by the VMEM tile budget."""
    budget_rows = max(packed, budget_bytes // (lane * itemsize))
    if rows <= budget_rows:
        return rows
    t = (budget_rows // packed) * packed
    cand = t
    while cand >= packed:
        if rows % cand == 0:
            return cand
        cand -= packed
    return max(packed, t)


def fake_dan_generator_forward(x: jax.Array) -> jax.Array:
    """Equivalent of FakeDanGenerator.forward: concat (x, x, x) along axis 1."""
    n, c, h, w = x.shape
    itemsize = jnp.dtype(x.dtype).itemsize
    m = c * h * w                                   # elements per sample

    lane, rows, pad, packed = _pick_layout(m, itemsize)
    budget = _tile_budget_bytes()
    tile_rows = min(_pick_tile_rows(rows, lane, itemsize, packed, budget), rows)
    row_tiles = pl.cdiv(rows, tile_rows)

    # Batch small samples into one grid step, but keep >= 2 parallel steps so
    # both v7x TensorCores (and the DMA pipeline) have work.
    ns_tile = 1
    if tile_rows == rows:
        per_sample_bytes = rows * lane * itemsize
        ns_budget = max(1, budget // per_sample_bytes)
        ns_tile = min(ns_budget, max(1, (n + 1) // 2))
        while ns_tile > 1 and n % ns_tile != 0:     # avoid masked edge tiles
            ns_tile -= 1
    n_tiles = pl.cdiv(n, ns_tile)

    # Layout-preserving lane-dense view (pad only when m % 128 != 0).
    x2 = x.reshape(n, m)
    if pad:
        x2 = jnp.pad(x2, ((0, 0), (0, pad)))
    x3 = x2.reshape(n, rows, lane)

    out4 = pl.pallas_call(
        _repeat3_kernel,
        out_shape=jax.ShapeDtypeStruct((n, _NUM_REPEATS, rows, lane), x.dtype),
        grid_spec=pltpu.PrefetchScalarGridSpec(
            num_scalar_prefetch=0,
            grid=(n_tiles, row_tiles),
            in_specs=[
                pl.BlockSpec((ns_tile, tile_rows, lane), lambda i, j: (i, j, 0)),
            ],
            out_specs=pl.BlockSpec(
                (ns_tile, _NUM_REPEATS, tile_rows, lane),
                lambda i, j: (i, 0, j, 0),
            ),
        ),
        compiler_params=pltpu.CompilerParams(
            dimension_semantics=("parallel", "parallel"),
            vmem_limit_bytes=_VMEM_LIMIT_BYTES,
        ),
        cost_estimate=pl.CostEstimate(
            flops=0,
            transcendentals=0,
            bytes_accessed=(1 + _NUM_REPEATS) * x.size * itemsize,
        ),
    )(x3)

    # (n, 3, rows, lane) -> (n, 3*c, h, w).  Pure metadata reshape when pad==0.
    out = out4.reshape(n, _NUM_REPEATS, rows * lane)
    if pad:
        out = out[:, :, :m]
    return out.reshape(n, _NUM_REPEATS * c, h, w)


if __name__ == "__main__":
    key = jax.random.PRNGKey(0)
    # Small NCHW input consistent with an image-generator module.
    x = jax.random.normal(key, (2, 4, 16, 16), dtype=jnp.float32)

    out = fake_dan_generator_forward(x)
    out = jax.block_until_ready(out)

    # Reference check against plain JAX concatenation (same semantics as torch.cat).
    ref = jnp.concatenate((x, x, x), axis=1)
    assert out.shape == (2, 12, 16, 16), out.shape
    assert out.dtype == x.dtype
    assert bool(jnp.array_equal(out, ref))

    print("KERNEL_OK")
</pallas_src>

<mosaic_0001>
module attributes {stable_mosaic.version = 11 : i64} {
  func.func @_repeat3_kernel(%arg0: i32, %arg1: i32, %arg2: memref<1x8x128xf32, #tpu.memory_space<vmem>>, %arg3: memref<1x3x8x128xf32, #tpu.memory_space<vmem>>) attributes {dimension_semantics = [#tpu.dimension_semantics<parallel>, #tpu.dimension_semantics<parallel>], iteration_bounds = array<i64: 2, 1>, scalar_prefetch = 0 : i64, scratch_operands = 0 : i64, tpu.core_type = #tpu.core_type<tc>, window_params = [{transform_indices = @transform_0, window_bounds = array<i64: 1, 8, 128>}, {transform_indices = @transform_1, window_bounds = array<i64: 1, 3, 8, 128>}]} {
    %c0 = arith.constant 0 : index
    %c0_0 = arith.constant 0 : index
    %c0_1 = arith.constant 0 : index
    %0 = vector.load %arg2[%c0, %c0_0, %c0_1] : memref<1x8x128xf32, #tpu.memory_space<vmem>>, vector<1x8x128xf32>
    %1 = vector.shape_cast %0 : vector<1x8x128xf32> to vector<1x1x8x128xf32>
    %2 = vector.shape_cast %1 : vector<1x1x8x128xf32> to vector<1x1x8x128xf32>
    %3 = vector.broadcast %2 : vector<1x1x8x128xf32> to vector<1x3x8x128xf32>
    %c0_2 = arith.constant 0 : index
    %c0_3 = arith.constant 0 : index
    %c0_4 = arith.constant 0 : index
    %c0_5 = arith.constant 0 : index
    %4 = vector.load %arg3[%c0_2, %c0_3, %c0_4, %c0_5] : memref<1x3x8x128xf32, #tpu.memory_space<vmem>>, vector<1x3x8x128xf32>
    tpu.vector_store %arg3[%c0_2, %c0_3, %c0_4, %c0_5], %3 {strides = array<i32>} : memref<1x3x8x128xf32, #tpu.memory_space<vmem>>, vector<1x3x8x128xf32>,
    return
  }
  func.func @transform_0(%arg0: i32, %arg1: i32) -> (i32, i32, i32) {
    %c0_i32 = arith.constant 0 : i32
    %c0_i32_0 = arith.constant 0 : i32
    return %arg0, %arg1, %c0_i32 : i32, i32, i32
  }
  func.func @transform_1(%arg0: i32, %arg1: i32) -> (i32, i32, i32, i32) {
    %c0_i32 = arith.constant 0 : i32
    %c0_i32_0 = arith.constant 0 : i32
    %c0_i32_1 = arith.constant 0 : i32
    return %arg0, %c0_i32, %arg1, %c0_i32_0 : i32, i32, i32, i32
  }
}

</mosaic_0001>

<llo_original>
// kernel: tpu_custom_call.1
$region0: #{tpu_custom_call.1}
  #allocation0 [shape = 'u32[]', space=smem, size = 0x4, offset = 0x4, fixed_abs, tag = 'smem constant byte address 0x4 - core index']
  #allocation1 [shape = 'u32[144,128]{1,0:T(1,128)}', space=vmem, size = 0x12000, scoped, tag = 'internal scratch']
  %s0 = inlined_call_operand.hbm [shape: f32[2,8,128], index: 0, kind: input, shape index: {}]
  %s1 = inlined_call_operand.hbm [shape: f32[2,3,8,128], index: 1, kind: output, shape index: {}]
  %s2 = sld [smem:[#allocation0]]
  $region41: #{tpu_custom_call.1} parent=0
    _
  %s4 = ssub.s32 1, %s2
  %s5 = scalar_select 0, %s4, %s2
  $region1: #{tpu_custom_call.1} parent=0
    #allocation2 [shape = 'u8[8192]{0}', space=vmem, size = 0x2000, scoped, tag = 'input window, operand 0']
    #allocation3 [shape = 's32[2]{0}', space=sflag, size = 0x8, scoped, tag = 'scoped memory for tpu_custom_call.1']
    #allocation4 [shape = 's32[2]{0}', space=sflag, size = 0x8, scoped, tag = 'scoped memory for tpu_custom_call.1']
    #allocation5 [shape = 'u8[24576]{0}', space=vmem, size = 0x6000, scoped, tag = 'output window, operand 0']
    %6 = vsyncpa [#allocation3], 0
    %s7 = scalar_lea.sflag [#allocation3], 1
    %8 = vsyncpa %s7, 0
    %9 = vsyncpa [#allocation4], 0
    %s10 = scalar_lea.sflag [#allocation4], 1
    %11 = vsyncpa %s10, 0
    loop: start=0, step=1, limit=4
    $region2: #{tpu_custom_call.1} parent=1 // loop_pre_header
      _
    $region3: #{tpu_custom_call.1} parent=1 // loop_header
      %s13 = sphi 0, %s17
      %p14 = scmp.ge.s32.totalorder %s13, 4
      %s20 = sphi 0, %s32
      %s21 = sphi 0, %s28
      %s22 = sphi 0, %s20
      %s23 = sphi 0, %s21
      %s24 = sphi 0, %s22
      %s25 = sphi 0, %s23
      %s37 = sphi 0, %s39
      %s40 = sphi 0, %s37
      %s41 = sphi 0, %s40
      %s57 = sphi 0, %s41
      %s65 = sphi 0, %s67
      %s68 = sphi 0, %s65
      %s69 = sphi 0, %s68
      %s85 = sphi 0, %s69
    $region4: #{tpu_custom_call.1} parent=1 // loop_header_branch
      %16 = sbr.rel (%p14) target = $region8
    $region5: #{tpu_custom_call.1} parent=1 // loop_body
      %s18 = ssub.s32 %s13, 1
      %s19 = ssub.s32 %s13, 2
      %s26 = sadd.s32 1, %s21
      %p27 = scmp.ge.s32.totalorder %s26, 1
      %s28 = scalar_select %p27, 0, %s26
      %s29 = sadd.s32 1, %s20
      %s30 = scalar_select %p27, %s29, %s20
      %p31 = scmp.ge.s32.totalorder %s30, 2
      %s32 = scalar_select %p31, 0, %s30
      %s33 = ssub.s32 %s20, %s32
      %s34 = ssub.s32 %s21, %s28
      %s35 = sor.u32 %s33, %s34
      %p36 = scmp.eq.s32.totalorder %s35, 0
      %s38 = sadd.s32 %s37, 1
      %s39 = scalar_select %p36, %s37, %s38
      %p42 = pneg %p36
      %p43 = scmp.eq.s32.totalorder %s13, 1
      %p44 = por %p42, %p43
      %p45 = scmp.ne.s32.totalorder %s37, %s40
      %p46 = scmp.eq.s32.totalorder %s13, 0
      %p47 = por %p45, %p46
      %p48 = scmp.ne.s32.totalorder %s37, %s40
      %p49 = scmp.eq.s32.totalorder %s18, 1
      %p50 = por %p48, %p49
      %p51 = scmp.ne.s32.totalorder %s40, %s41
      %p52 = scmp.eq.s32.totalorder %s18, 0
      %p53 = por %p51, %p52
      %p54 = scmp.ne.s32.totalorder %s40, %s41
      %p55 = scmp.eq.s32.totalorder %s19, 1
      %p56 = por %p54, %p55
      %p58 = scmp.ne.s32.totalorder %s41, %s57
      %p59 = scmp.eq.s32.totalorder %s19, 0
      %p60 = por %p58, %p59
      %s61 = ssub.s32 %s20, %s32
      %s62 = ssub.s32 %s21, %s28
      %s63 = sor.u32 %s61, %s62
      %p64 = scmp.eq.s32.totalorder %s63, 0
      %s66 = sadd.s32 %s65, 1
      %s67 = scalar_select %p64, %s65, %s66
      %p70 = pneg %p64
      %p71 = scmp.eq.s32.totalorder %s13, 1
      %p72 = por %p70, %p71
      %p73 = scmp.ne.s32.totalorder %s65, %s68
      %p74 = scmp.eq.s32.totalorder %s13, 0
      %p75 = por %p73, %p74
      %p76 = scmp.ne.s32.totalorder %s65, %s68
      %p77 = scmp.eq.s32.totalorder %s18, 1
      %p78 = por %p76, %p77
      %p79 = scmp.ne.s32.totalorder %s68, %s69
      %p80 = scmp.eq.s32.totalorder %s18, 0
      %p81 = por %p79, %p80
      %p82 = scmp.ne.s32.totalorder %s68, %s69
      %p83 = scmp.eq.s32.totalorder %s19, 1
      %p84 = por %p82, %p83
      %p86 = scmp.ne.s32.totalorder %s69, %s85
      %p87 = scmp.eq.s32.totalorder %s19, 0
      %p88 = por %p86, %p87
      %p89 = scmp.le.s32.totalorder 1, %s13
      %p90 = scmp.lt.s32.totalorder %s13, 3
      %p91 = pnand %p89, %p90
      %p92 = pneg %p91
      // Predicated region
      $region9: #{tpu_custom_call.1} parent=5 // pred_check
        _
      $region10: #{tpu_custom_call.1} parent=5 // pred_check_branch
        %94 = sbr.rel (%p91) target = $region12
      $region11: #{tpu_custom_call.1} parent=5 // pred_region
        %s95 = ssub.s32 %s13, 1
      $region12: #{tpu_custom_call.1} parent=5 // pred_fallthru
        _
      %p96 = scmp.lt.s32.totalorder %s13, 2
      // Predicated region
      $region13: #{tpu_custom_call.1} parent=5 // pred_check
        %p97 = pneg %p96
      $region14: #{tpu_custom_call.1} parent=5 // pred_check_branch
        %99 = sbr.rel (%p97) target = $region16
      $region15: #{tpu_custom_call.1} parent=5 // pred_region
        // Predicated region
        $region17: #{tpu_custom_call.1} parent=15 // pred_check
          %p100 = pneg %p47
        $region18: #{tpu_custom_call.1} parent=15 // pred_check_branch
          %102 = sbr.rel (%p100) target = $region20
        $region19: #{tpu_custom_call.1} parent=15 // pred_region
          %s103 = sand.u32 %s37, 1
          %s104 = scalar_lea.sflag [#allocation3], %s103
          %s105 = sand.u32 %s37, 1
          %s106 = smul.addr %s105, 8
          %s107 = scalar_lea.vmem [#allocation2], %s106
          %s109 = ssub.s32 128, 128
          %110 = vsyncadd %s104, %s109
          %s111 = sadd.s32 %s21, %s20
          %s112 = smul.addr %s111, 128
          %s113 = scalar_lea.hbm %s0, %s112
          %s115 = sshll.u32 %s107, 4
          %s116 = int_to_ptr.vmem [resolvable:$true] %s115
          %118 = dma.hbm_to_vmem [thread:$0]  %s113, 128, %s116, %s104
        $region20: #{tpu_custom_call.1} parent=15 // pred_fallthru
          _
      $region16: #{tpu_custom_call.1} parent=5 // pred_fallthru
        _
      %p119 = scmp.le.s32.totalorder 1, %s13
      %p120 = scmp.lt.s32.totalorder %s13, 3
      %p121 = pnand %p119, %p120
      %p122 = pneg %p121
      // Predicated region
      $region21: #{tpu_custom_call.1} parent=5 // pred_check
        _
      $region22: #{tpu_custom_call.1} parent=5 // pred_check_branch
        %124 = sbr.rel (%p121) target = $region24
      $region23: #{tpu_custom_call.1} parent=5 // pred_region
        %s125 = ssub.s32 %s13, 1
        %s126 = sand.u32 %s40, 1
        %s127 = scalar_lea.sflag [#allocation3], %s126
        %s128 = sand.u32 %s40, 1
        %s129 = smul.addr %s128, 8
        %s130 = scalar_lea.vmem [#allocation2], %s129
        // Predicated region
        $region25: #{tpu_custom_call.1} parent=23 // pred_check
          %p131 = pneg %p53
        $region26: #{tpu_custom_call.1} parent=23 // pred_check_branch
          %133 = sbr.rel (%p131) target = $region28
        $region27: #{tpu_custom_call.1} parent=23 // pred_region
          %134 = dma.done %s127, 128
        $region28: #{tpu_custom_call.1} parent=23 // pred_fallthru
          _
        %s135 = sand.u32 %s40, 1
        %s136 = scalar_lea.sflag [#allocation3], %s135
        %s137 = sand.u32 %s40, 1
        %s138 = smul.addr %s137, 8
        %s139 = scalar_lea.vmem [#allocation2], %s138
        %p140 = pneg %p53
        %p141 = pneg %p50
        %p142 = pneg %p81
        %p143 = pneg %p78
        %s144 = sand.u32 %s68, 1
        %s145 = scalar_lea.sflag [#allocation4], %s144
        %s146 = sand.u32 %s68, 1
        %s147 = smul.addr %s146, 24
        %s148 = scalar_lea.vmem [#allocation5], %s147
        %v149 = vld [vmem:[%s130] sm:$0xff]
        %150 = vst [vmem:[%s148] sm:$0xff] %v149
        %151 = vst [vmem:[%s148 + $0x8] sm:$0xff] %v149
        %152 = vst [vmem:[%s148 + $0x10] sm:$0xff] %v149
        %s153 = sand.u32 %s68, 1
        %s154 = scalar_lea.sflag [#allocation4], %s153
        %s155 = sand.u32 %s68, 1
        %s156 = smul.addr %s155, 24
        %s157 = scalar_lea.vmem [#allocation5], %s156
        // Predicated region
        $region29: #{tpu_custom_call.1} parent=23 // pred_check
          %p158 = pneg %p78
        $region30: #{tpu_custom_call.1} parent=23 // pred_check_branch
          %160 = sbr.rel (%p158) target = $region32
        $region31: #{tpu_custom_call.1} parent=23 // pred_region
          %s162 = ssub.s32 384, 384
          %163 = vsyncadd %s154, %s162
          %s164 = smul.addr %s22, 3
          %s165 = sadd.s32 %s23, %s164
          %s166 = smul.addr %s165, 128
          %s167 = scalar_lea.hbm %s1, %s166
          %s168 = sshll.u32 %s157, 4
          %s169 = int_to_ptr.vmem [resolvable:$true] %s168
          %174 = dma.vmem_to_hbm [thread:$0]  %s169, 384, %s167, %s154, 128, 128, 8
        $region32: #{tpu_custom_call.1} parent=23 // pred_fallthru
          _
      $region24: #{tpu_custom_call.1} parent=5 // pred_fallthru
        _
      %p175 = scmp.le.s32.totalorder 2, %s13
      // Predicated region
      $region33: #{tpu_custom_call.1} parent=5 // pred_check
        %p176 = pneg %p175
      $region34: #{tpu_custom_call.1} parent=5 // pred_check_branch
        %178 = sbr.rel (%p176) target = $region36
      $region35: #{tpu_custom_call.1} parent=5 // pred_region
        %s179 = ssub.s32 %s13, 2
        // Predicated region
        $region37: #{tpu_custom_call.1} parent=35 // pred_check
          %p180 = pneg %p84
        $region38: #{tpu_custom_call.1} parent=35 // pred_check_branch
          %182 = sbr.rel (%p180) target = $region40
        $region39: #{tpu_custom_call.1} parent=35 // pred_region
          %s183 = sand.u32 %s69, 1
          %s184 = scalar_lea.sflag [#allocation4], %s183
          %s185 = sand.u32 %s69, 1
          %s186 = smul.addr %s185, 24
          %s187 = scalar_lea.vmem [#allocation5], %s186
          %188 = dma.done %s184, 384
        $region40: #{tpu_custom_call.1} parent=35 // pred_fallthru
          _
      $region36: #{tpu_custom_call.1} parent=5 // pred_fallthru
        _
    $region6: #{tpu_custom_call.1} parent=1 // loop_footer
      %s17 = sadd.s32 1, %s13
    $region7: #{tpu_custom_call.1} parent=1 // loop_footer_branch
      %12 = sbr.rel target = $region3
    $region8: #{tpu_custom_call.1} parent=1 // loop_exit
      _
    %189 = vsyncpa [#allocation3], 1
    %s190 = scalar_lea.sflag [#allocation3], 1
    %191 = vsyncpa %s190, 1
    %192 = vsyncpa [#allocation4], 1
    %s193 = scalar_lea.sflag [#allocation4], 1
    %194 = vsyncpa %s193, 1

</llo_original>
